<compile_context>
chip_gen: v6e
topology: v6e:2x2x1
jax: 0.10.0
libtpu: 0.0.40
codegen_flags: <defaults>
</compile_context>

<pallas_src>
import functools

import jax
import jax.numpy as jnp
from jax.experimental import pallas as pl
from jax.experimental.pallas import tpu as pltpu

_FOCAL_ALPHA = 0.25


# ------------------------------- small helpers -------------------------------

def _round_up(x, m):
    return ((x + m - 1) // m) * m


def _largest_tile(n, cap):
    """Largest multiple-of-8 divisor of n (a multiple of 8) that is <= cap."""
    if n <= cap:
        return n
    best = 8
    d = 8
    while d <= cap:
        if n % d == 0:
            best = d
        d += 8
    return best


def _vmem_limits():
    """(scoped vmem limit, per-step element budget) derived from physical VMEM."""
    cap = 64 * 1024 * 1024          # conservative fallback (v7x has 64 MiB / TC)
    try:
        cap = int(pltpu.get_tpu_info().vmem_capacity_bytes)
    except Exception:
        pass
    limit = min((cap * 3) // 4, 96 * 1024 * 1024)
    # per-step [ts, tn, Wt] elementwise tile budget: keep ~<=1/3 of the scoped limit
    # for live f32 temporaries + double-buffered bf16 target tiles.
    budget = max(64 * 1024, limit // 96)
    return limit, budget


def _pick_mask_tiles(n_pad, Ht, Wt, wm, elem_budget):
    """Row tile tn, height tile ts and padded height for the mask kernel."""
    tn = n_pad
    for cand in (32, 16):
        # tn*wm must be a multiple of 128 for the lane-blocked src2 BlockSpec
        if n_pad % cand == 0 and (cand * wm) % 128 == 0:
            tn = cand
            break
    ht16 = _round_up(Ht, 16)
    ts_cap = max(16, elem_budget // max(tn * Wt, 1))
    ts_cap = max(16, (ts_cap // 16) * 16)
    ts = min(ts_cap, ht16)
    ht_pad = _round_up(Ht, ts)
    return tn, ts, ht_pad


def _interp_matrix(out_size, in_size):
    """1-D bilinear interpolation matrix, PyTorch align_corners=False semantics."""
    i = jnp.arange(out_size, dtype=jnp.float32)
    src = (i + 0.5) * (in_size / out_size) - 0.5
    src = jnp.maximum(src, 0.0)                  # torch clamps negative coords to 0
    i0 = jnp.minimum(jnp.floor(src).astype(jnp.int32), in_size - 1)
    i1 = jnp.minimum(i0 + 1, in_size - 1)
    l1 = src - i0.astype(jnp.float32)
    l0 = 1.0 - l1
    rows = jnp.arange(out_size)
    W = jnp.zeros((out_size, in_size), jnp.float32)
    W = W.at[rows, i0].add(l0)
    W = W.at[rows, i1].add(l1)
    return W


# ----------------------------- Pallas kernels --------------------------------

def _ce_rows_kernel(logits_ref, tc_ref, w_ref, out_ref):
    """Per-row weighted NLL of log-softmax.

    logits_ref: [tm, C1]  model dtype (cast to f32 inside)
    tc_ref:     [tm, 1]   int32 target class id
    w_ref:      [tm, 1]   f32   class weight (0 for padded rows)
    out_ref:    [tm, 1]   f32   weight * nll per row
    """
    x = logits_ref[...].astype(jnp.float32)
    tc = tc_ref[...]
    w = w_ref[...]
    m_rows, n_cls = x.shape
    iota = jax.lax.broadcasted_iota(jnp.int32, (m_rows, n_cls), 1)
    onehot = (iota == tc).astype(jnp.float32)
    m = jnp.max(x, axis=-1, keepdims=True)
    lse = m + jnp.log(jnp.sum(jnp.exp(x - m), axis=-1, keepdims=True))
    picked = jnp.sum(onehot * x, axis=-1, keepdims=True)
    out_ref[...] = w * (lse - picked)


def _mask_kernel(src_ref, wwT_ref, wh_ref, tgt_ref,
                 focal_ref, dnum_ref, dden_ref,
                 facc_ref, nacc_ref, dacc_ref,
                 *, inv_lout, alpha, ht_valid, apply_hmask):
    """One (head, row-tile, height-tile) step of the mask losses.

    src_ref : [hm, tn*wm]   bf16  low-res logits of this (head, row-tile), hm-major
    wwT_ref : [wm, Wt]      bf16  width interpolation matrix (transposed), resident
    wh_ref  : [ts, hm]      bf16  height interpolation rows of this height tile
    tgt_ref : [ts, tn, Wt]  bf16  binary target tile (pre-transposed on the host)

    focal/dnum/dden_ref : [tn, 1] f32 outputs, written on the last height tile.
    facc/nacc/dacc_ref  : [tn, Wt] f32 lane-parallel accumulators (VMEM scratch).
    """
    k = pl.program_id(2)

    ts, _ = wh_ref.shape
    tn = tgt_ref.shape[1]
    wm = src_ref.shape[1] // tn

    @pl.when(k == 0)
    def _():
        facc_ref[...] = jnp.zeros_like(facc_ref)
        nacc_ref[...] = jnp.zeros_like(nacc_ref)
        dacc_ref[...] = jnp.zeros_like(dacc_ref)

    # Separable bilinear upsample, height pass first (single 2D bf16 MXU matmul):
    #   [ts, hm] @ [hm, tn*wm] -> [ts, tn*wm]  (f32 accumulate)
    z = jnp.dot(wh_ref[...], src_ref[...], preferred_element_type=jnp.float32)
    # Width pass: regroup the small intermediate and do one more 2D matmul:
    #   [ts*tn, wm] @ [wm, Wt] -> [ts*tn, Wt]
    zb = z.astype(jnp.bfloat16).reshape(ts * tn, wm)
    x = jnp.dot(zb, wwT_ref[...], preferred_element_type=jnp.float32)
    x = x.reshape(ts, tn, wwT_ref.shape[1])

    t_b = tgt_ref[...] > 0.5                       # binary targets

    # exact sigmoid with a single exp + divide (no approx-recip bias in the dice sums)
    e = jnp.exp(-jnp.abs(x))
    denom = 1.0 + e
    prob = jnp.where(x >= 0.0, 1.0, e) / denom
    # BCE-with-logits for binary targets: softplus(-x) if t else softplus(x).
    # log(denom) == log1p(e); e in (0, 1] so the naive form loses <= ~6e-8 absolute,
    # negligible versus the loss tolerance, and avoids relying on a log1p lowering.
    y = jnp.where(t_b, -x, x)
    ce = jnp.maximum(y, 0.0) + jnp.log(denom)
    one_m = jnp.where(t_b, 1.0 - prob, prob)       # 1 - p_t
    alpha_t = jnp.where(t_b, alpha, 1.0 - alpha)
    focal = (alpha_t * ce) * (one_m * one_m)       # gamma = 2
    prob_pos = jnp.where(t_b, prob, 0.0)           # prob * t

    if apply_hmask:
        # Zero out the zero-padded target rows (Ht padded up to a multiple of ts).
        hrow = jax.lax.broadcasted_iota(jnp.int32, (ts, 1, 1), 0) + k * ts
        hv = (hrow < ht_valid).astype(jnp.float32)
        focal = focal * hv
        prob = prob * hv

    # Lane-parallel partial sums: reduce only the leading (height) axis each step (pure
    # VALU); the cross-lane XLU reduction happens once, on the last height tile.
    facc_ref[...] += jnp.sum(focal, axis=0)
    nacc_ref[...] += jnp.sum(prob_pos, axis=0)
    dacc_ref[...] += jnp.sum(prob, axis=0)

    @pl.when(k == pl.num_programs(2) - 1)
    def _():
        focal_ref[...] = jnp.sum(facc_ref[...], axis=-1, keepdims=True) * inv_lout
        dnum_ref[...] = 2.0 * jnp.sum(nacc_ref[...], axis=-1, keepdims=True)
        dden_ref[...] = jnp.sum(dacc_ref[...], axis=-1, keepdims=True)


# --------------------------------- criterion ----------------------------------

class SetCriterionPallas:
    """JAX/Pallas reimplementation of SetCriterion.forward (ATM matching: src idx = label,
    tgt idx = arange), single device (world_size = 1)."""

    def __init__(self, num_classes, weight_dict, losses, eos_coef=0.1):
        self.num_classes = num_classes
        self.weight_dict = weight_dict
        self.losses = losses
        self.eos_coef = eos_coef
        self.empty_weight = jnp.ones((num_classes + 1,), jnp.float32).at[-1].set(eos_coef)
        self._interp_cache = {}
        self._vmem_limit, self._elem_budget = _vmem_limits()

    # ---- cached separable interpolation matrices (bf16, height rows padded) ----
    def _interp(self, Ht, Hm, Wt, Wm, ht_pad):
        key = (Ht, Hm, Wt, Wm, ht_pad)
        if key not in self._interp_cache:
            wh = _interp_matrix(Ht, Hm)                                    # [Ht, Hm]
            wh = jnp.pad(wh, ((0, ht_pad - Ht), (0, 0))).astype(jnp.bfloat16)
            wwT = _interp_matrix(Wt, Wm).T.astype(jnp.bfloat16)           # [Wm, Wt]
            self._interp_cache[key] = (wh, wwT)
        return self._interp_cache[key]

    # ---- labels loss (weighted CE), all heads of identical shape in one call ----
    def _ce_losses(self, logits_heads, labels):
        n_heads, B, Q, C1 = logits_heads.shape
        tc = jnp.full((B, Q), self.num_classes, jnp.int32)
        for b, lab in enumerate(labels):
            tc = tc.at[b, lab].set(lab)
        tc_flat = tc.reshape(B * Q)
        w_row = self.empty_weight[tc_flat]                                 # [B*Q]
        denom = jnp.sum(w_row)

        bq = B * Q
        bq_pad = max(8, _round_up(bq, 8))
        tm = _largest_tile(bq_pad, 512)

        tc_p = jnp.pad(tc_flat, (0, bq_pad - bq))                          # class 0, w 0
        w_p = jnp.pad(w_row, (0, bq_pad - bq))
        tc_all = jnp.tile(tc_p, (n_heads,)).reshape(-1, 1)
        w_all = jnp.tile(w_p, (n_heads,)).reshape(-1, 1)
        logits_p = jnp.pad(logits_heads.reshape(n_heads, bq, C1),
                           ((0, 0), (0, bq_pad - bq), (0, 0)))
        logits_p = logits_p.reshape(n_heads * bq_pad, C1)
        rows = n_heads * bq_pad

        wnll = pl.pallas_call(
            _ce_rows_kernel,
            out_shape=jax.ShapeDtypeStruct((rows, 1), jnp.float32),
            grid_spec=pltpu.PrefetchScalarGridSpec(
                num_scalar_prefetch=0,
                grid=(rows // tm,),
                in_specs=[pl.BlockSpec((tm, C1), lambda r: (r, 0)),
                          pl.BlockSpec((tm, 1), lambda r: (r, 0)),
                          pl.BlockSpec((tm, 1), lambda r: (r, 0))],
                out_specs=pl.BlockSpec((tm, 1), lambda r: (r, 0))),
            compiler_params=pltpu.CompilerParams(
                dimension_semantics=("parallel",)),
        )(logits_p, tc_all, w_all)

        return jnp.sum(wnll.reshape(n_heads, bq_pad), axis=1) / denom      # [n_heads]

    # ---- target masks: nested-tensor padding + concat + row padding ----
    def _build_targets(self, targets):
        masks = [jnp.asarray(t["masks"]) for t in targets]
        Ht = max(int(m.shape[-2]) for m in masks)
        Wt = max(int(m.shape[-1]) for m in masks)
        padded = [jnp.pad(m.astype(jnp.float32),
                          ((0, 0), (0, Ht - m.shape[-2]), (0, Wt - m.shape[-1])))
                  for m in masks]
        tgt = jnp.concatenate(padded, axis=0)                               # tgt idx = arange
        n = int(tgt.shape[0])
        n_pad = max(16, _round_up(n, 16))
        tgt = jnp.pad(tgt, ((0, n_pad - n), (0, 0), (0, 0)))                # [n_pad, Ht, Wt]
        tsum = jnp.sum(tgt, axis=(1, 2))                                    # per-row sum(t)
        valid = (jnp.arange(n_pad) < n).astype(jnp.float32)
        return tgt, tsum, valid, n_pad, Ht, Wt

    # ---- src masks gather (src idx = label) + row padding ----
    def _gather_src(self, pred_masks, labels, n_pad):
        rows = [pred_masks[b][lab] for b, lab in enumerate(labels)]
        src = jnp.concatenate(rows, axis=0)                                 # [N, Hm, Wm]
        n = src.shape[0]
        return jnp.pad(src, ((0, n_pad - n), (0, 0), (0, 0)))

    # ---- mask losses (focal + dice) for a group of same-shape heads ----
    def _mask_losses_group(self, src_heads, tgt, tsum, valid, num_masks, n_pad, Ht, Wt):
        G, _, hm, wm = src_heads.shape
        tn, ts, ht_pad = _pick_mask_tiles(n_pad, Ht, Wt, wm, self._elem_budget)
        apply_hmask = ht_pad != Ht
        n_row_blocks = n_pad // tn
        n_h_blocks = ht_pad // ts

        wh, wwT = self._interp(Ht, hm, Wt, wm, ht_pad)

        # Host-side layout plumbing (bf16, once per group):
        #   src  -> [G, hm, n_pad*wm]  so the kernel's height pass is one 2D matmul
        #   tgt  -> [ht_pad, n_pad, Wt] so target tiles arrive as [ts, tn, Wt]
        src2 = jnp.transpose(src_heads.astype(jnp.bfloat16), (0, 2, 1, 3))
        src2 = src2.reshape(G, hm, n_pad * wm)
        tgt_t = jnp.pad(tgt, ((0, 0), (0, ht_pad - Ht), (0, 0)))
        tgt_t = jnp.transpose(tgt_t, (1, 0, 2)).astype(jnp.bfloat16)

        kernel = functools.partial(
            _mask_kernel,
            inv_lout=1.0 / float(Ht * Wt),
            alpha=_FOCAL_ALPHA,
            ht_valid=Ht,
            apply_hmask=apply_hmask)

        out_sds = jax.ShapeDtypeStruct((G * n_pad, 1), jnp.float32)
        out_spec = pl.BlockSpec((tn, 1), lambda h, i, k: (h * n_row_blocks + i, 0))

        # TODO(synk): target tiles are re-streamed per head (v5e HBM-bandwidth concern);
        # on v7x, verify the two leading "parallel" axes are split across both TensorCores.
        focal, dnum, dden = pl.pallas_call(
            kernel,
            out_shape=(out_sds, out_sds, out_sds),
            grid_spec=pltpu.PrefetchScalarGridSpec(
                num_scalar_prefetch=0,
                grid=(G, n_row_blocks, n_h_blocks),
                in_specs=[
                    pl.BlockSpec((None, hm, tn * wm), lambda h, i, k: (h, 0, i)),
                    pl.BlockSpec((wm, Wt), lambda h, i, k: (0, 0)),          # resident
                    pl.BlockSpec((ts, hm), lambda h, i, k: (k, 0)),
                    pl.BlockSpec((ts, tn, Wt), lambda h, i, k: (k, i, 0)),
                ],
                out_specs=(out_spec, out_spec, out_spec),
                scratch_shapes=[pltpu.VMEM((tn, Wt), jnp.float32)] * 3,
            ),
            compiler_params=pltpu.CompilerParams(
                dimension_semantics=("parallel", "parallel", "arbitrary"),
                vmem_limit_bytes=self._vmem_limit,
            ),
        )(src2, wwT, wh, tgt_t)

        focal = focal.reshape(G, n_pad)
        dnum = dnum.reshape(G, n_pad)
        dden = dden.reshape(G, n_pad) + tsum[None, :]     # sum(t) is head independent
        dice = 1.0 - (dnum + 1.0) / (dden + 1.0)
        validb = valid[None, :]
        loss_mask = jnp.sum(focal * validb, axis=1) / num_masks
        loss_dice = jnp.sum(dice * validb, axis=1) / num_masks
        return loss_mask, loss_dice

    # ---- forward ----
    def forward(self, outputs, targets):
        for loss in self.losses:
            if loss not in ("labels", "masks"):
                raise ValueError(f"do you really want to compute {loss} loss?")

        labels = [jnp.asarray(t["labels"], jnp.int32) for t in targets]
        # TODO(synk): torch.distributed all_reduce of num_masks is skipped (world_size == 1).
        num_masks = float(sum(int(l.shape[0]) for l in labels))
        num_masks = max(num_masks, 1.0)

        heads = [outputs] + list(outputs.get("aux_outputs", []))
        suffixes = [""] + [f"_{i}" for i in range(len(heads) - 1)]
        losses = {}

        if "labels" in self.losses:
            groups = {}
            for hidx, h in enumerate(heads):
                groups.setdefault(tuple(h["pred_logits"].shape), []).append(hidx)
            for _, hidxs in groups.items():
                stacked = jnp.stack([heads[h]["pred_logits"] for h in hidxs], axis=0)
                ce = self._ce_losses(stacked, labels)
                for j, hidx in enumerate(hidxs):
                    losses["loss_ce" + suffixes[hidx]] = ce[j]

        if "masks" in self.losses:
            mask_heads = []
            for hidx, h in enumerate(heads):
                if h["pred_masks"].ndim != 4:
                    losses["no_loss" + suffixes[hidx]] = 0
                else:
                    mask_heads.append(hidx)
            if mask_heads:
                tgt, tsum, valid, n_pad, Ht, Wt = self._build_targets(targets)
                groups = {}
                for hidx in mask_heads:
                    groups.setdefault(tuple(heads[hidx]["pred_masks"].shape), []).append(hidx)
                for _, hidxs in groups.items():
                    src = jnp.stack(
                        [self._gather_src(heads[h]["pred_masks"], labels, n_pad)
                         for h in hidxs], axis=0)
                    lm, ld = self._mask_losses_group(
                        src, tgt, tsum, valid, num_masks, n_pad, Ht, Wt)
                    for j, hidx in enumerate(hidxs):
                        losses["loss_mask" + suffixes[hidx]] = lm[j]
                        losses["loss_dice" + suffixes[hidx]] = ld[j]
        return losses


# ------------------------- pure-JAX reference (for checks) --------------------

def _ref_forward(outputs, targets, num_classes, eos_coef):
    labels = [jnp.asarray(t["labels"], jnp.int32) for t in targets]
    num_masks = max(float(sum(int(l.shape[0]) for l in labels)), 1.0)
    empty_w = jnp.ones((num_classes + 1,), jnp.float32).at[-1].set(eos_coef)

    def one_head(head, suffix):
        out = {}
        logits = head["pred_logits"].astype(jnp.float32)
        B, Q, _ = logits.shape
        tc = jnp.full((B, Q), num_classes, jnp.int32)
        for b, lab in enumerate(labels):
            tc = tc.at[b, lab].set(lab)
        logp = jax.nn.log_softmax(logits, axis=-1)
        nll = -jnp.take_along_axis(logp, tc[..., None], axis=-1)[..., 0]
        w = empty_w[tc]
        out["loss_ce" + suffix] = jnp.sum(w * nll) / jnp.sum(w)

        pm = head["pred_masks"].astype(jnp.float32)
        src = jnp.concatenate([pm[b][lab] for b, lab in enumerate(labels)], 0)
        tgt = jnp.concatenate([t["masks"].astype(jnp.float32) for t in targets], 0)
        Ht, Wt = tgt.shape[-2:]
        wh = _interp_matrix(Ht, pm.shape[-2])
        ww = _interp_matrix(Wt, pm.shape[-1])
        up = jnp.einsum('sh,nhw,tw->nst', wh, src, ww)
        x = up.reshape(up.shape[0], -1)
        t = tgt.reshape(tgt.shape[0], -1)
        p = jax.nn.sigmoid(x)
        ce = jnp.maximum(x, 0.0) - x * t + jnp.log1p(jnp.exp(-jnp.abs(x)))
        p_t = p * t + (1 - p) * (1 - t)
        focal = (_FOCAL_ALPHA * t + (1 - _FOCAL_ALPHA) * (1 - t)) * ce * (1 - p_t) ** 2
        out["loss_mask" + suffix] = jnp.sum(jnp.mean(focal, axis=1)) / num_masks
        num = 2 * jnp.sum(p * t, 1)
        den = jnp.sum(p, 1) + jnp.sum(t, 1)
        out["loss_dice" + suffix] = jnp.sum(1 - (num + 1) / (den + 1)) / num_masks
        return out

    res = one_head(outputs, "")
    for i, aux in enumerate(outputs.get("aux_outputs", [])):
        res.update(one_head(aux, f"_{i}"))
    return res


# --------------------------------- demo --------------------------------------

if __name__ == "__main__":
    key = jax.random.PRNGKey(0)
    num_classes = 4
    B, Q, C1 = 2, 4, num_classes + 1
    Hm = Wm = 8            # predicted mask resolution
    Ht = Wt = 16           # target mask resolution (kernel bilinearly upsamples 8 -> 16)

    k1, k2, k3, k4, k5, k6 = jax.random.split(key, 6)
    pred_logits = jax.random.normal(k1, (B, Q, C1), jnp.float32)
    pred_masks = jax.random.normal(k2, (B, Q, Hm, Wm), jnp.float32)
    aux_logits = jax.random.normal(k5, (B, Q, C1), jnp.float32)
    aux_masks = jax.random.normal(k6, (B, Q, Hm, Wm), jnp.float32)

    labels0 = jnp.array([0, 2], jnp.int32)
    labels1 = jnp.array([1, 2, 3], jnp.int32)
    masks0 = (jax.random.uniform(k3, (2, Ht, Wt)) > 0.5).astype(jnp.float32)
    masks1 = (jax.random.uniform(k4, (3, Ht, Wt)) > 0.5).astype(jnp.float32)

    outputs = {
        "pred_logits": pred_logits,
        "pred_masks": pred_masks,
        "aux_outputs": [{"pred_logits": aux_logits, "pred_masks": aux_masks}],
    }
    targets = [
        {"labels": labels0, "masks": masks0},
        {"labels": labels1, "masks": masks1},
    ]

    criterion = SetCriterionPallas(
        num_classes=num_classes,
        weight_dict={"loss_ce": 1.0, "loss_mask": 20.0, "loss_dice": 1.0},
        losses=["labels", "masks"],
        eos_coef=0.1,
    )

    losses = criterion.forward(outputs, targets)
    losses = jax.block_until_ready(losses)

    expected = {"loss_ce", "loss_mask", "loss_dice",
                "loss_ce_0", "loss_mask_0", "loss_dice_0"}
    assert set(losses.keys()) == expected, sorted(losses.keys())

    ref = _ref_forward(outputs, targets, num_classes, 0.1)
    for name in sorted(expected):
        v = float(losses[name])
        r = float(ref[name])
        assert jnp.isfinite(v), f"{name} not finite"
        # slightly loose tolerance: the mask kernel feeds the MXU bf16 (f32 reference)
        assert abs(v - r) <= 5e-3 + 4e-2 * abs(r), f"{name}: pallas={v} ref={r}"

    print("KERNEL_OK")
</pallas_src>

<mosaic_0001>
module attributes {stable_mosaic.version = 11 : i64} {
  func.func @_ce_rows_kernel(%arg0: i32, %arg1: memref<8x5xf32, #tpu.memory_space<vmem>>, %arg2: memref<8x1xi32, #tpu.memory_space<vmem>>, %arg3: memref<8x1xf32, #tpu.memory_space<vmem>>, %arg4: memref<8x1xf32, #tpu.memory_space<vmem>>) attributes {dimension_semantics = [#tpu.dimension_semantics<parallel>], iteration_bounds = array<i64: 2>, scalar_prefetch = 0 : i64, scratch_operands = 0 : i64, tpu.core_type = #tpu.core_type<tc>, window_params = [{transform_indices = @transform_0, window_bounds = array<i64: 8, 5>}, {transform_indices = @transform_1, window_bounds = array<i64: 8, 1>}, {transform_indices = @transform_2, window_bounds = array<i64: 8, 1>}, {transform_indices = @transform_3, window_bounds = array<i64: 8, 1>}]} {
    %c0 = arith.constant 0 : index
    %c0_0 = arith.constant 0 : index
    %0 = vector.load %arg1[%c0, %c0_0] : memref<8x5xf32, #tpu.memory_space<vmem>>, vector<8x5xf32>
    %c0_1 = arith.constant 0 : index
    %c0_2 = arith.constant 0 : index
    %1 = vector.load %arg2[%c0_1, %c0_2] : memref<8x1xi32, #tpu.memory_space<vmem>>, vector<8x1xi32>
    %c0_3 = arith.constant 0 : index
    %c0_4 = arith.constant 0 : index
    %2 = vector.load %arg3[%c0_3, %c0_4] : memref<8x1xf32, #tpu.memory_space<vmem>>, vector<8x1xf32>
    %3 = tpu.iota {dimensions = array<i32: 1>} : vector<8x5xi32>
    %4 = vector.broadcast %1 : vector<8x1xi32> to vector<8x5xi32>
    %5 = arith.cmpi eq, %3, %4 : vector<8x5xi32>
    %6 = arith.extui %5 : vector<8x5xi1> to vector<8x5xi32>
    %7 = arith.sitofp %6 : vector<8x5xi32> to vector<8x5xf32>
    %cst = arith.constant dense<0xFF800000> : vector<8xf32>
    %8 = vector.multi_reduction <maximumf>, %0, %cst [1] : vector<8x5xf32> to vector<8xf32>
    %9 = vector.shape_cast %8 : vector<8xf32> to vector<8x1xf32>
    %10 = vector.broadcast %9 : vector<8x1xf32> to vector<8x5xf32>
    %11 = arith.subf %0, %10 : vector<8x5xf32>
    %12 = math.exp %11 : vector<8x5xf32>
    %cst_5 = arith.constant dense<0.000000e+00> : vector<8xf32>
    %13 = vector.multi_reduction <add>, %12, %cst_5 [1] : vector<8x5xf32> to vector<8xf32>
    %14 = vector.shape_cast %13 : vector<8xf32> to vector<8x1xf32>
    %15 = math.log %14 : vector<8x1xf32>
    %16 = arith.addf %9, %15 : vector<8x1xf32>
    %17 = arith.mulf %7, %0 : vector<8x5xf32>
    %cst_6 = arith.constant dense<0.000000e+00> : vector<8xf32>
    %18 = vector.multi_reduction <add>, %17, %cst_6 [1] : vector<8x5xf32> to vector<8xf32>
    %19 = vector.shape_cast %18 : vector<8xf32> to vector<8x1xf32>
    %20 = arith.subf %16, %19 : vector<8x1xf32>
    %21 = arith.mulf %2, %20 : vector<8x1xf32>
    %c0_7 = arith.constant 0 : index
    %c0_8 = arith.constant 0 : index
    %22 = vector.load %arg4[%c0_7, %c0_8] : memref<8x1xf32, #tpu.memory_space<vmem>>, vector<8x1xf32>
    tpu.vector_store %arg4[%c0_7, %c0_8], %21 {strides = array<i32>} : memref<8x1xf32, #tpu.memory_space<vmem>>, vector<8x1xf32>,
    return
  }
  func.func @transform_0(%arg0: i32) -> (i32, i32) {
    %c0_i32 = arith.constant 0 : i32
    %c0_i32_0 = arith.constant 0 : i32
    return %arg0, %c0_i32 : i32, i32
  }
  func.func @transform_1(%arg0: i32) -> (i32, i32) {
    %c0_i32 = arith.constant 0 : i32
    %c0_i32_0 = arith.constant 0 : i32
    return %arg0, %c0_i32 : i32, i32
  }
  func.func @transform_2(%arg0: i32) -> (i32, i32) {
    %c0_i32 = arith.constant 0 : i32
    %c0_i32_0 = arith.constant 0 : i32
    return %arg0, %c0_i32 : i32, i32
  }
  func.func @transform_3(%arg0: i32) -> (i32, i32) {
    %c0_i32 = arith.constant 0 : i32
    %c0_i32_0 = arith.constant 0 : i32
    return %arg0, %c0_i32 : i32, i32
  }
}

</mosaic_0001>

<llo_original>
// kernel: tpu_custom_call.1
$region0: #{tpu_custom_call.1}
  #allocation0 [shape = 'u32[]', space=smem, size = 0x4, offset = 0x4, fixed_abs, tag = 'smem constant byte address 0x4 - core index']
  #allocation1 [shape = 'u32[144,128]{1,0:T(1,128)}', space=vmem, size = 0x12000, scoped, tag = 'internal scratch']
  %s0 = inlined_call_operand.vmem [shape: f32[16,5], index: 0, kind: input, shape index: {}]
  %s1 = inlined_call_operand.vmem [shape: s32[16,1], index: 1, kind: input, shape index: {}]
  %s2 = inlined_call_operand.vmem [shape: f32[16,1], index: 2, kind: input, shape index: {}]
  %s3 = inlined_call_operand.vmem [shape: f32[16,1], index: 3, kind: output, shape index: {}]
  %s4 = sld [smem:[#allocation0]]
  $region45: #{tpu_custom_call.1} parent=0
    _
  %s6 = ssub.s32 1, %s4
  %s7 = scalar_select 0, %s6, %s4
  loop: start=0, step=1, limit=4
  $region2: #{tpu_custom_call.1} parent=0 // loop_pre_header
    _
  $region3: #{tpu_custom_call.1} parent=0 // loop_header
    %s9 = sphi 0, %s13
    %p10 = scmp.ge.s32.totalorder %s9, 4
    %s19 = sphi 0, %s21
    %s22 = sphi 0, %s19
    %s23 = sphi 0, %s22
    %s39 = sphi 0, %s23
    %s45 = sphi 0, %s47
    %s48 = sphi 0, %s45
    %s49 = sphi 0, %s48
    %s65 = sphi 0, %s49
    %s71 = sphi 0, %s73
    %s74 = sphi 0, %s71
    %s75 = sphi 0, %s74
    %s91 = sphi 0, %s75
    %s97 = sphi 0, %s99
    %s100 = sphi 0, %s97
    %s101 = sphi 0, %s100
    %s117 = sphi 0, %s101
  $region4: #{tpu_custom_call.1} parent=0 // loop_header_branch
    %12 = sbr.rel (%p10) target = $region8
  $region5: #{tpu_custom_call.1} parent=0 // loop_body
    %s14 = ssub.s32 %s9, 1
    %s15 = ssub.s32 %s9, 2
    %s16 = sadd.s32 %s9, 1
    %s17 = ssub.s32 %s9, %s16
    %p18 = scmp.eq.s32.totalorder %s17, 0
    %s20 = sadd.s32 %s19, 1
    %s21 = scalar_select %p18, %s19, %s20
    %p24 = pneg %p18
    %p25 = scmp.eq.s32.totalorder %s9, 1
    %p26 = por %p24, %p25
    %p27 = scmp.ne.s32.totalorder %s19, %s22
    %p28 = scmp.eq.s32.totalorder %s9, 0
    %p29 = por %p27, %p28
    %p30 = scmp.ne.s32.totalorder %s19, %s22
    %p31 = scmp.eq.s32.totalorder %s14, 1
    %p32 = por %p30, %p31
    %p33 = scmp.ne.s32.totalorder %s22, %s23
    %p34 = scmp.eq.s32.totalorder %s14, 0
    %p35 = por %p33, %p34
    %p36 = scmp.ne.s32.totalorder %s22, %s23
    %p37 = scmp.eq.s32.totalorder %s15, 1
    %p38 = por %p36, %p37
    %p40 = scmp.ne.s32.totalorder %s23, %s39
    %p41 = scmp.eq.s32.totalorder %s15, 0
    %p42 = por %p40, %p41
    %s43 = ssub.s32 %s9, %s16
    %p44 = scmp.eq.s32.totalorder %s43, 0
    %s46 = sadd.s32 %s45, 1
    %s47 = scalar_select %p44, %s45, %s46
    %p50 = pneg %p44
    %p51 = scmp.eq.s32.totalorder %s9, 1
    %p52 = por %p50, %p51
    %p53 = scmp.ne.s32.totalorder %s45, %s48
    %p54 = scmp.eq.s32.totalorder %s9, 0
    %p55 = por %p53, %p54
    %p56 = scmp.ne.s32.totalorder %s45, %s48
    %p57 = scmp.eq.s32.totalorder %s14, 1
    %p58 = por %p56, %p57
    %p59 = scmp.ne.s32.totalorder %s48, %s49
    %p60 = scmp.eq.s32.totalorder %s14, 0
    %p61 = por %p59, %p60
    %p62 = scmp.ne.s32.totalorder %s48, %s49
    %p63 = scmp.eq.s32.totalorder %s15, 1
    %p64 = por %p62, %p63
    %p66 = scmp.ne.s32.totalorder %s49, %s65
    %p67 = scmp.eq.s32.totalorder %s15, 0
    %p68 = por %p66, %p67
    %s69 = ssub.s32 %s9, %s16
    %p70 = scmp.eq.s32.totalorder %s69, 0
    %s72 = sadd.s32 %s71, 1
    %s73 = scalar_select %p70, %s71, %s72
    %p76 = pneg %p70
    %p77 = scmp.eq.s32.totalorder %s9, 1
    %p78 = por %p76, %p77
    %p79 = scmp.ne.s32.totalorder %s71, %s74
    %p80 = scmp.eq.s32.totalorder %s9, 0
    %p81 = por %p79, %p80
    %p82 = scmp.ne.s32.totalorder %s71, %s74
    %p83 = scmp.eq.s32.totalorder %s14, 1
    %p84 = por %p82, %p83
    %p85 = scmp.ne.s32.totalorder %s74, %s75
    %p86 = scmp.eq.s32.totalorder %s14, 0
    %p87 = por %p85, %p86
    %p88 = scmp.ne.s32.totalorder %s74, %s75
    %p89 = scmp.eq.s32.totalorder %s15, 1
    %p90 = por %p88, %p89
    %p92 = scmp.ne.s32.totalorder %s75, %s91
    %p93 = scmp.eq.s32.totalorder %s15, 0
    %p94 = por %p92, %p93
    %s95 = ssub.s32 %s9, %s16
    %p96 = scmp.eq.s32.totalorder %s95, 0
    %s98 = sadd.s32 %s97, 1
    %s99 = scalar_select %p96, %s97, %s98
    %p102 = pneg %p96
    %p103 = scmp.eq.s32.totalorder %s9, 1
    %p104 = por %p102, %p103
    %p105 = scmp.ne.s32.totalorder %s97, %s100
    %p106 = scmp.eq.s32.totalorder %s9, 0
    %p107 = por %p105, %p106
    %p108 = scmp.ne.s32.totalorder %s97, %s100
    %p109 = scmp.eq.s32.totalorder %s14, 1
    %p110 = por %p108, %p109
    %p111 = scmp.ne.s32.totalorder %s100, %s101
    %p112 = scmp.eq.s32.totalorder %s14, 0
    %p113 = por %p111, %p112
    %p114 = scmp.ne.s32.totalorder %s100, %s101
    %p115 = scmp.eq.s32.totalorder %s15, 1
    %p116 = por %p114, %p115
    %p118 = scmp.ne.s32.totalorder %s101, %s117
    %p119 = scmp.eq.s32.totalorder %s15, 0
    %p120 = por %p118, %p119
    %p121 = scmp.le.s32.totalorder 1, %s9
    %p122 = scmp.lt.s32.totalorder %s9, 3
    %p123 = pnand %p121, %p122
    %p124 = pneg %p123
    // Predicated region
    $region9: #{tpu_custom_call.1} parent=5 // pred_check
      _
    $region10: #{tpu_custom_call.1} parent=5 // pred_check_branch
      %126 = sbr.rel (%p123) target = $region12
    $region11: #{tpu_custom_call.1} parent=5 // pred_region
      %s127 = ssub.s32 %s9, 1
    $region12: #{tpu_custom_call.1} parent=5 // pred_fallthru
      _
    %p128 = scmp.lt.s32.totalorder %s9, 2
    // Predicated region
    $region13: #{tpu_custom_call.1} parent=5 // pred_check
      %p129 = pneg %p128
    $region14: #{tpu_custom_call.1} parent=5 // pred_check_branch
      %131 = sbr.rel (%p129) target = $region16
    $region15: #{tpu_custom_call.1} parent=5 // pred_region
      // Predicated region
      $region17: #{tpu_custom_call.1} parent=15 // pred_check
        %p132 = pneg %p29
      $region18: #{tpu_custom_call.1} parent=15 // pred_check_branch
        %134 = sbr.rel (%p132) target = $region20
      $region19: #{tpu_custom_call.1} parent=15 // pred_region
        %p135 = scmp.lt.s32.totalorder %s9, 1
        %s136 = scalar_select %p135, %s9, 1
        %s137 = smul.addr %s136, 8
        %s138 = scalar_lea.vmem %s0, %s137
      $region20: #{tpu_custom_call.1} parent=15 // pred_fallthru
        _
      // Predicated region
      $region21: #{tpu_custom_call.1} parent=15 // pred_check
        %p139 = pneg %p55
      $region22: #{tpu_custom_call.1} parent=15 // pred_check_branch
        %141 = sbr.rel (%p139) target = $region24
      $region23: #{tpu_custom_call.1} parent=15 // pred_region
        %p142 = scmp.lt.s32.totalorder %s9, 1
        %s143 = scalar_select %p142, %s9, 1
        %s144 = smul.addr %s143, 8
        %s145 = scalar_lea.vmem %s1, %s144
      $region24: #{tpu_custom_call.1} parent=15 // pred_fallthru
        _
      // Predicated region
      $region25: #{tpu_custom_call.1} parent=15 // pred_check
        %p146 = pneg %p81
      $region26: #{tpu_custom_call.1} parent=15 // pred_check_branch
        %148 = sbr.rel (%p146) target = $region28
      $region27: #{tpu_custom_call.1} parent=15 // pred_region
        %p149 = scmp.lt.s32.totalorder %s9, 1
        %s150 = scalar_select %p149, %s9, 1
        %s151 = smul.addr %s150, 8
        %s152 = scalar_lea.vmem %s2, %s151
      $region28: #{tpu_custom_call.1} parent=15 // pred_fallthru
        _
    $region16: #{tpu_custom_call.1} parent=5 // pred_fallthru
      _
    %p153 = scmp.le.s32.totalorder 1, %s9
    %p154 = scmp.lt.s32.totalorder %s9, 3
    %p155 = pnand %p153, %p154
    %p156 = pneg %p155
    // Predicated region
    $region29: #{tpu_custom_call.1} parent=5 // pred_check
      _
    $region30: #{tpu_custom_call.1} parent=5 // pred_check_branch
      %158 = sbr.rel (%p155) target = $region32
    $region31: #{tpu_custom_call.1} parent=5 // pred_region
      %s159 = ssub.s32 %s9, 1
      %p160 = scmp.lt.s32.totalorder %s14, 1
      %s161 = scalar_select %p160, %s14, 1
      %s162 = smul.addr %s161, 8
      %s163 = scalar_lea.vmem %s0, %s162
      %p164 = pneg %p35
      %p165 = pneg %p32
      %p166 = scmp.lt.s32.totalorder %s14, 1
      %s167 = scalar_select %p166, %s14, 1
      %s168 = smul.addr %s167, 8
      %s169 = scalar_lea.vmem %s1, %s168
      %p170 = pneg %p61
      %p171 = pneg %p58
      %p172 = scmp.lt.s32.totalorder %s14, 1
      %s173 = scalar_select %p172, %s14, 1
      %s174 = smul.addr %s173, 8
      %s175 = scalar_lea.vmem %s2, %s174
      %p176 = pneg %p87
      %p177 = pneg %p84
      %p178 = pneg %p113
      %p179 = pneg %p110
      %p180 = scmp.lt.s32.totalorder %s14, 1
      %s181 = scalar_select %p180, %s14, 1
      %s182 = smul.addr %s181, 8
      %s183 = scalar_lea.vmem %s3, %s182
      %p184 = scmp.lt.s32.totalorder %s14, 1
      %s185 = scalar_select %p184, %s14, 1
      %s186 = smul.addr %s185, 8
      %s187 = scalar_lea.vmem %s0, %s186
      %p188 = scmp.lt.s32.totalorder %s14, 1
      %s189 = scalar_select %p188, %s14, 1
      %s190 = smul.addr %s189, 8
      %s191 = scalar_lea.vmem %s1, %s190
      %p192 = scmp.lt.s32.totalorder %s14, 1
      %s193 = scalar_select %p192, %s14, 1
      %s194 = smul.addr %s193, 8
      %s195 = scalar_lea.vmem %s2, %s194
      %p196 = scmp.lt.s32.totalorder %s14, 1
      %s197 = scalar_select %p196, %s14, 1
      %s198 = smul.addr %s197, 8
      %s199 = scalar_lea.vmem %s3, %s198
      %v200 = vld [vmem:[%s187] sm:$0xff]
      %v201 = vld [vmem:[%s191] sm:$0xff]
      %v202 = vld [vmem:[%s195] sm:$0xff]
      %v203 = vlaneseq
      %v204 = vand.u32 %v203, 127
      %205 = vset.pattern.permute.xlu0 0
      %206 = vperm.xlu0 %205, %v201
      %v207 = vpop.permute.xlu0 %206
      %vm208 = vcmp.eq.s32.totalorder %v204, %v207
      %v209 = vsel %vm208, 1, 0
      %v210 = vcvt.s32.f32 %v209
      %vm211 = vcmask 39936
      %v212 = vsel %vm211, %v200, -inf
      %213 = vmax.xlane.f32.xlu0 %v212
      %v214 = vpop.xlane.xlu0 %213
      %v215 = vsub.f32 %v200, %v214
      %v216 = vmul.f32 %v215, 1.442695
      %v217 = vpow.pop %v216
      %v218 = vsel %vm211, %v217, 0.0
      %219 = vadd.xlane.f32.xlu0 %v218
      %v220 = vpop.xlane.xlu0 %219
      %v221 = vlog2.pop %v220
      %v222 = vmul.f32 %v221, 0.6931472
      %v223 = vadd.f32 %v214, %v222
      %v224 = vmul.f32 %v210, %v200
      %v225 = vsel %vm211, %v224, 0.0
      %226 = vadd.xlane.f32.xlu0 %v225
      %v227 = vpop.xlane.xlu0 %226
      %v228 = vsub.f32 %v223, %v227
      %v229 = vmul.f32 %v202, %v228
      %vm230 = vcmask 7168
      %231 = vst.msk [vmem:[%s199] sm:$0xff] %vm230, %v229
      %p232 = scmp.lt.s32.totalorder %s14, 1
      %s233 = scalar_select %p232, %s14, 1
      %s234 = smul.addr %s233, 8
      %s235 = scalar_lea.vmem %s3, %s234
      // Predicated region
      $region33: #{tpu_custom_call.1} parent=31 // pred_check
        %p236 = pneg %p110
      $region34: #{tpu_custom_call.1} parent=31 // pred_check_branch
        %238 = sbr.rel (%p236) target = $region36
      $region35: #{tpu_custom_call.1} parent=31 // pred_region
        _
      $region36: #{tpu_custom_call.1} parent=31 // pred_fallthru
        _
    $region32: #{tpu_custom_call.1} parent=5 // pred_fallthru
      _
    %p239 = scmp.le.s32.totalorder 2, %s9
    // Predicated region
    $region37: #{tpu_custom_call.1} parent=5 // pred_check
      %p240 = pneg %p239
    $region38: #{tpu_custom_call.1} parent=5 // pred_check_branch
      %242 = sbr.rel (%p240) target = $region40
    $region39: #{tpu_custom_call.1} parent=5 // pred_region
      %s243 = ssub.s32 %s9, 2
      // Predicated region
      $region41: #{tpu_custom_call.1} parent=39 // pred_check
        %p244 = pneg %p116
      $region42: #{tpu_custom_call.1} parent=39 // pred_check_branch
        %246 = sbr.rel (%p244) target = $region44
      $region43: #{tpu_custom_call.1} parent=39 // pred_region
        %p247 = scmp.lt.s32.totalorder %s15, 1
        %s248 = scalar_select %p247, %s15, 1
        %s249 = smul.addr %s248, 8
        %s250 = scalar_lea.vmem %s3, %s249
      $region44: #{tpu_custom_call.1} parent=39 // pred_fallthru
        _
    $region40: #{tpu_custom_call.1} parent=5 // pred_fallthru
      _
  $region6: #{tpu_custom_call.1} parent=0 // loop_footer
    %s13 = sadd.s32 1, %s9
  $region7: #{tpu_custom_call.1} parent=0 // loop_footer_branch
    %8 = sbr.rel target = $region3
  $region8: #{tpu_custom_call.1} parent=0 // loop_exit
    _

</llo_original>
